<compile_context>
chip_gen: v7x
topology: tpu7x:2x2x1
jax: 0.10.0
libtpu: 0.0.40
codegen_flags: <defaults>
</compile_context>

<pallas_src>
import functools

import jax
import jax.numpy as jnp
from jax import lax
from jax.experimental import pallas as pl
from jax.experimental.pallas import tpu as pltpu


def _layernorm_ane_kernel(x_ref, w_ref, b_ref, o_ref, *, eps, clip_mag,
                          elementwise_affine):
    # x_ref: (C, tile_S) -- channels on sublanes, sequence on lanes.
    x = x_ref[...].astype(jnp.float32)
    if clip_mag is not None:
        x = jnp.clip(x, -clip_mag, clip_mag)

    # Per-lane (per sequence position) statistics over the channel axis.
    mean = jnp.mean(x, axis=0, keepdims=True)        # (1, tile_S)  -> XLU
    zero_mean = x - mean
    var = jnp.mean(zero_mean * zero_mean, axis=0, keepdims=True)
    out = zero_mean * lax.rsqrt(var + eps)           # rsqrt -> EUP slot

    if elementwise_affine:
        # PyTorch ANE order: out = (out + bias) * weight
        out = (out + b_ref[...].astype(jnp.float32)) * \
            w_ref[...].astype(jnp.float32)

    o_ref[...] = out.astype(o_ref.dtype)


def _pick_tile_s(S, C, itemsize):
    """Largest lane tile whose double-buffered in+out copies fit a ~12 MiB
    VMEM budget (safe on v5e/v6e/v7x with a 32 MiB scoped limit)."""
    budget_bytes = 12 * 1024 * 1024
    per_lane_bytes = 4 * C * itemsize          # 2x input + 2x output buffers
    max_tile = budget_bytes // max(per_lane_bytes, 1)
    max_tile = max(128, (max_tile // 128) * 128)   # lane-dense multiple of 128
    max_tile = min(max_tile, 4096)
    if S <= max_tile:
        return S            # full-extent block along S: always layout-legal
    return max_tile         # multiple of 128; ragged last tile handled by cdiv grid


def layernorm_ane(inputs, weight, bias, *, num_channels, eps=1e-5,
                  clip_mag=None, elementwise_affine=True, tile_s=None):
    """LayerNormANE forward. Accepts rank-3 (B, S, C) or rank-4 BC1S input.

    Returns a BC1S tensor (B, C, 1, S), exactly like the PyTorch module.
    """
    if inputs.ndim == 3 and inputs.shape[2] == num_channels:
        # (B, S, C) -> (B, C, 1, S).  This transpose is part of the module's
        # semantics for rank-3 inputs; the primary BC1S path is transpose-free.
        inputs = jnp.expand_dims(jnp.swapaxes(inputs, 1, 2), 2)
    assert inputs.ndim == 4, "expected BC1S input"
    assert inputs.shape[1] == num_channels

    B, C, one, S = inputs.shape
    assert one == 1

    # (B, C, 1, S) -> (B, C, S): size-1 squeeze, no HBM data movement.
    x = jnp.squeeze(inputs, axis=2)

    if tile_s is None:
        tile_s = _pick_tile_s(S, C, jnp.dtype(inputs.dtype).itemsize)
    grid = (B, pl.cdiv(S, tile_s))

    # Per-channel params as a single resident (C, 1) block (broadcast over lanes
    # inside the kernel).
    w2 = weight.reshape(C, 1).astype(jnp.float32)
    b2 = bias.reshape(C, 1).astype(jnp.float32)

    kernel = functools.partial(
        _layernorm_ane_kernel,
        eps=eps,
        clip_mag=clip_mag,
        elementwise_affine=elementwise_affine,
    )

    out = pl.pallas_call(
        kernel,
        out_shape=jax.ShapeDtypeStruct((B, C, S), inputs.dtype),
        grid_spec=pltpu.PrefetchScalarGridSpec(
            num_scalar_prefetch=0,
            grid=grid,
            in_specs=[
                # Batch dim squeezed out of the kernel view; (C, tile_S) tile.
                pl.BlockSpec((None, C, tile_s), lambda b, s: (b, 0, s)),
                pl.BlockSpec((C, 1), lambda b, s: (0, 0)),   # weight, resident
                pl.BlockSpec((C, 1), lambda b, s: (0, 0)),   # bias, resident
            ],
            out_specs=pl.BlockSpec((None, C, tile_s), lambda b, s: (b, 0, s)),
        ),
        compiler_params=pltpu.CompilerParams(
            dimension_semantics=("parallel", "parallel"),
            vmem_limit_bytes=32 * 1024 * 1024,
        ),
    )(x, w2, b2)

    # (B, C, S) -> (B, C, 1, S): free expand.
    return jnp.expand_dims(out, 2)


def _reference(inputs, weight, bias, *, num_channels, eps=1e-5, clip_mag=None,
               elementwise_affine=True):
    """Pure-JAX port of the PyTorch forward for verification."""
    if inputs.ndim == 3 and inputs.shape[2] == num_channels:
        inputs = jnp.expand_dims(jnp.swapaxes(inputs, 1, 2), 2)
    if clip_mag is not None:
        inputs = jnp.clip(inputs, -clip_mag, clip_mag)
    mean = jnp.mean(inputs, axis=1, keepdims=True)
    zm = inputs - mean
    denom = lax.rsqrt(jnp.mean(zm * zm, axis=1, keepdims=True) + eps)
    out = zm * denom
    if elementwise_affine:
        out = (out + bias.reshape(1, num_channels, 1, 1)) * \
            weight.reshape(1, num_channels, 1, 1)
    return out


if __name__ == "__main__":
    key = jax.random.PRNGKey(0)
    k1, k2 = jax.random.split(key)

    # Case 1: BC1S input, default parameter init (ones/zeros, as in
    # LayerNormANE._reset_parameters).
    B, C, S = 2, 32, 8
    x = jax.random.normal(k1, (B, C, 1, S), dtype=jnp.float32)
    weight = jnp.ones((C,), jnp.float32)
    bias = jnp.zeros((C,), jnp.float32)

    out = jax.block_until_ready(
        layernorm_ane(x, weight, bias, num_channels=C, eps=1e-5))
    ref = _reference(x, weight, bias, num_channels=C, eps=1e-5)
    assert out.shape == (B, C, 1, S)
    assert jnp.allclose(out, ref, atol=1e-5, rtol=1e-5)

    # Case 2: rank-3 (B, S, C) input with clip_mag and non-trivial affine
    # params; forced tile_s=128 so the cdiv ragged-last-tile path is exercised.
    B2, S2, C2 = 1, 200, 32
    x3 = 3.0 * jax.random.normal(k2, (B2, S2, C2), dtype=jnp.float32)
    w2 = 0.5 + jax.random.uniform(k1, (C2,), dtype=jnp.float32)
    b2 = 0.1 * jax.random.normal(k2, (C2,), dtype=jnp.float32)

    out2 = jax.block_until_ready(
        layernorm_ane(x3, w2, b2, num_channels=C2, eps=1e-5, clip_mag=2.0,
                      tile_s=128))
    ref2 = _reference(x3, w2, b2, num_channels=C2, eps=1e-5, clip_mag=2.0)
    assert out2.shape == (B2, C2, 1, S2)
    assert jnp.allclose(out2, ref2, atol=1e-5, rtol=1e-5)

    print("KERNEL_OK")
</pallas_src>

<mosaic_0001>
module attributes {stable_mosaic.version = 11 : i64} {
  func.func @_layernorm_ane_kernel(%arg0: i32, %arg1: i32, %arg2: memref<1x32x8xf32, #tpu.memory_space<vmem>>, %arg3: memref<32x1xf32, #tpu.memory_space<vmem>>, %arg4: memref<32x1xf32, #tpu.memory_space<vmem>>, %arg5: memref<1x32x8xf32, #tpu.memory_space<vmem>>) attributes {dimension_semantics = [#tpu.dimension_semantics<parallel>, #tpu.dimension_semantics<parallel>], iteration_bounds = array<i64: 2, 1>, scalar_prefetch = 0 : i64, scratch_operands = 0 : i64, tpu.core_type = #tpu.core_type<tc>, window_params = [{transform_indices = @transform_0, window_bounds = array<i64: 1, 32, 8>}, {pipeline_mode = #tpu.pipeline_mode<synchronous>, transform_indices = @transform_1, window_bounds = array<i64: 32, 1>}, {pipeline_mode = #tpu.pipeline_mode<synchronous>, transform_indices = @transform_2, window_bounds = array<i64: 32, 1>}, {transform_indices = @transform_3, window_bounds = array<i64: 1, 32, 8>}]} {
    %c0 = arith.constant 0 : index
    %c0_0 = arith.constant 0 : index
    %c0_1 = arith.constant 0 : index
    %0 = vector.load %arg2[%c0, %c0_0, %c0_1] : memref<1x32x8xf32, #tpu.memory_space<vmem>>, vector<1x32x8xf32>
    %1 = vector.shape_cast %0 : vector<1x32x8xf32> to vector<32x8xf32>
    %cst = arith.constant dense<0.000000e+00> : vector<8xf32>
    %2 = vector.multi_reduction <add>, %1, %cst [0] : vector<32x8xf32> to vector<8xf32>
    %3 = vector.shape_cast %2 : vector<8xf32> to vector<1x8xf32>
    %cst_2 = arith.constant 3.200000e+01 : f32
    %4 = vector.broadcast %cst_2 : f32 to vector<1x8xf32>
    %5 = arith.divf %3, %4 : vector<1x8xf32>
    %6 = vector.broadcast %5 : vector<1x8xf32> to vector<32x8xf32>
    %7 = arith.subf %1, %6 : vector<32x8xf32>
    %8 = arith.mulf %7, %7 : vector<32x8xf32>
    %cst_3 = arith.constant dense<0.000000e+00> : vector<8xf32>
    %9 = vector.multi_reduction <add>, %8, %cst_3 [0] : vector<32x8xf32> to vector<8xf32>
    %10 = vector.shape_cast %9 : vector<8xf32> to vector<1x8xf32>
    %cst_4 = arith.constant 3.200000e+01 : f32
    %11 = vector.broadcast %cst_4 : f32 to vector<1x8xf32>
    %12 = arith.divf %10, %11 : vector<1x8xf32>
    %cst_5 = arith.constant 9.99999974E-6 : f32
    %13 = vector.broadcast %cst_5 : f32 to vector<1x8xf32>
    %14 = arith.addf %12, %13 : vector<1x8xf32>
    %15 = math.rsqrt %14 : vector<1x8xf32>
    %16 = vector.broadcast %15 : vector<1x8xf32> to vector<32x8xf32>
    %17 = arith.mulf %7, %16 : vector<32x8xf32>
    %c0_6 = arith.constant 0 : index
    %c0_7 = arith.constant 0 : index
    %18 = vector.load %arg4[%c0_6, %c0_7] : memref<32x1xf32, #tpu.memory_space<vmem>>, vector<32x1xf32>
    %19 = vector.broadcast %18 : vector<32x1xf32> to vector<32x8xf32>
    %20 = arith.addf %17, %19 : vector<32x8xf32>
    %c0_8 = arith.constant 0 : index
    %c0_9 = arith.constant 0 : index
    %21 = vector.load %arg3[%c0_8, %c0_9] : memref<32x1xf32, #tpu.memory_space<vmem>>, vector<32x1xf32>
    %22 = vector.broadcast %21 : vector<32x1xf32> to vector<32x8xf32>
    %23 = arith.mulf %20, %22 : vector<32x8xf32>
    %c0_10 = arith.constant 0 : index
    %c0_11 = arith.constant 0 : index
    %c0_12 = arith.constant 0 : index
    %24 = vector.load %arg5[%c0_10, %c0_11, %c0_12] : memref<1x32x8xf32, #tpu.memory_space<vmem>>, vector<1x32x8xf32>
    %25 = vector.shape_cast %24 : vector<1x32x8xf32> to vector<32x8xf32>
    %26 = vector.shape_cast %23 : vector<32x8xf32> to vector<1x32x8xf32>
    tpu.vector_store %arg5[%c0_10, %c0_11, %c0_12], %26 {strides = array<i32>} : memref<1x32x8xf32, #tpu.memory_space<vmem>>, vector<1x32x8xf32>,
    return
  }
  func.func @transform_0(%arg0: i32, %arg1: i32) -> (i32, i32, i32) {
    %c0_i32 = arith.constant 0 : i32
    %c0_i32_0 = arith.constant 0 : i32
    return %arg0, %c0_i32, %arg1 : i32, i32, i32
  }
  func.func @transform_1(%arg0: i32, %arg1: i32) -> (i32, i32) {
    %c0_i32 = arith.constant 0 : i32
    %c0_i32_0 = arith.constant 0 : i32
    %c0_i32_1 = arith.constant 0 : i32
    return %c0_i32, %c0_i32_0 : i32, i32
  }
  func.func @transform_2(%arg0: i32, %arg1: i32) -> (i32, i32) {
    %c0_i32 = arith.constant 0 : i32
    %c0_i32_0 = arith.constant 0 : i32
    %c0_i32_1 = arith.constant 0 : i32
    return %c0_i32, %c0_i32_0 : i32, i32
  }
  func.func @transform_3(%arg0: i32, %arg1: i32) -> (i32, i32, i32) {
    %c0_i32 = arith.constant 0 : i32
    %c0_i32_0 = arith.constant 0 : i32
    return %arg0, %c0_i32, %arg1 : i32, i32, i32
  }
}

</mosaic_0001>

<llo_original>
// kernel: tpu_custom_call.1
$region0: #{tpu_custom_call.1}
  #allocation0 [shape = 'u32[]', space=smem, size = 0x4, offset = 0x4, fixed_abs, tag = 'smem constant byte address 0x4 - core index']
  #allocation1 [shape = 'u32[144,128]{1,0:T(1,128)}', space=vmem, size = 0x12000, scoped, tag = 'internal scratch']
  %s0 = inlined_call_operand.vmem [shape: f32[2,32,8], index: 0, kind: input, shape index: {}]
  %s1 = inlined_call_operand.vmem [shape: f32[32,1], index: 1, kind: input, shape index: {}]
  %s2 = inlined_call_operand.vmem [shape: f32[32,1], index: 2, kind: input, shape index: {}]
  %s3 = inlined_call_operand.vmem [shape: f32[2,32,8], index: 3, kind: output, shape index: {}]
  %s4 = sld [smem:[#allocation0]]
  $region45: #{tpu_custom_call.1} parent=0
    _
  %s6 = ssub.s32 1, %s4
  %s7 = scalar_select 0, %s6, %s4
  loop: start=0, step=1, limit=4
  $region2: #{tpu_custom_call.1} parent=0 // loop_pre_header
    _
  $region3: #{tpu_custom_call.1} parent=0 // loop_header
    %s9 = sphi 0, %s13
    %p10 = scmp.ge.s32.totalorder %s9, 4
    %s16 = sphi 0, %s28
    %s17 = sphi 0, %s24
    %s18 = sphi 0, %s16
    %s19 = sphi 0, %s17
    %s20 = sphi 0, %s18
    %s21 = sphi 0, %s19
    %s33 = sphi 0, %s35
    %s36 = sphi 0, %s33
    %s37 = sphi 0, %s36
    %s53 = sphi 0, %s37
    %s57 = sphi 0, %s57
    %s59 = sphi 0, %s57
    %s60 = sphi 0, %s59
    %s74 = sphi 0, %s60
    %s78 = sphi 0, %s78
    %s80 = sphi 0, %s78
    %s81 = sphi 0, %s80
    %s95 = sphi 0, %s81
    %s103 = sphi 0, %s105
    %s106 = sphi 0, %s103
    %s107 = sphi 0, %s106
    %s123 = sphi 0, %s107
  $region4: #{tpu_custom_call.1} parent=0 // loop_header_branch
    %12 = sbr.rel (%p10) target = $region8
  $region5: #{tpu_custom_call.1} parent=0 // loop_body
    %s14 = ssub.s32 %s9, 1
    %s15 = ssub.s32 %s9, 2
    %s22 = sadd.s32 1, %s17
    %p23 = scmp.ge.s32.totalorder %s22, 1
    %s24 = scalar_select %p23, 0, %s22
    %s25 = sadd.s32 1, %s16
    %s26 = scalar_select %p23, %s25, %s16
    %p27 = scmp.ge.s32.totalorder %s26, 2
    %s28 = scalar_select %p27, 0, %s26
    %s29 = ssub.s32 %s16, %s28
    %s30 = ssub.s32 %s17, %s24
    %s31 = sor.u32 %s29, %s30
    %p32 = scmp.eq.s32.totalorder %s31, 0
    %s34 = sadd.s32 %s33, 1
    %s35 = scalar_select %p32, %s33, %s34
    %p38 = pneg %p32
    %p39 = scmp.eq.s32.totalorder %s9, 1
    %p40 = por %p38, %p39
    %p41 = scmp.ne.s32.totalorder %s33, %s36
    %p42 = scmp.eq.s32.totalorder %s9, 0
    %p43 = por %p41, %p42
    %p44 = scmp.ne.s32.totalorder %s33, %s36
    %p45 = scmp.eq.s32.totalorder %s14, 1
    %p46 = por %p44, %p45
    %p47 = scmp.ne.s32.totalorder %s36, %s37
    %p48 = scmp.eq.s32.totalorder %s14, 0
    %p49 = por %p47, %p48
    %p50 = scmp.ne.s32.totalorder %s36, %s37
    %p51 = scmp.eq.s32.totalorder %s15, 1
    %p52 = por %p50, %p51
    %p54 = scmp.ne.s32.totalorder %s37, %s53
    %p55 = scmp.eq.s32.totalorder %s15, 0
    %p56 = por %p54, %p55
    %s58 = sadd.s32 %s57, 1
    %p61 = scmp.eq.s32.totalorder %s9, 1
    %p62 = scmp.ne.s32.totalorder %s57, %s59
    %p63 = scmp.eq.s32.totalorder %s9, 0
    %p64 = por %p62, %p63
    %p65 = scmp.ne.s32.totalorder %s57, %s59
    %p66 = scmp.eq.s32.totalorder %s14, 1
    %p67 = por %p65, %p66
    %p68 = scmp.ne.s32.totalorder %s59, %s60
    %p69 = scmp.eq.s32.totalorder %s14, 0
    %p70 = por %p68, %p69
    %p71 = scmp.ne.s32.totalorder %s59, %s60
    %p72 = scmp.eq.s32.totalorder %s15, 1
    %p73 = por %p71, %p72
    %p75 = scmp.ne.s32.totalorder %s60, %s74
    %p76 = scmp.eq.s32.totalorder %s15, 0
    %p77 = por %p75, %p76
    %s79 = sadd.s32 %s78, 1
    %p82 = scmp.eq.s32.totalorder %s9, 1
    %p83 = scmp.ne.s32.totalorder %s78, %s80
    %p84 = scmp.eq.s32.totalorder %s9, 0
    %p85 = por %p83, %p84
    %p86 = scmp.ne.s32.totalorder %s78, %s80
    %p87 = scmp.eq.s32.totalorder %s14, 1
    %p88 = por %p86, %p87
    %p89 = scmp.ne.s32.totalorder %s80, %s81
    %p90 = scmp.eq.s32.totalorder %s14, 0
    %p91 = por %p89, %p90
    %p92 = scmp.ne.s32.totalorder %s80, %s81
    %p93 = scmp.eq.s32.totalorder %s15, 1
    %p94 = por %p92, %p93
    %p96 = scmp.ne.s32.totalorder %s81, %s95
    %p97 = scmp.eq.s32.totalorder %s15, 0
    %p98 = por %p96, %p97
    %s99 = ssub.s32 %s16, %s28
    %s100 = ssub.s32 %s17, %s24
    %s101 = sor.u32 %s99, %s100
    %p102 = scmp.eq.s32.totalorder %s101, 0
    %s104 = sadd.s32 %s103, 1
    %s105 = scalar_select %p102, %s103, %s104
    %p108 = pneg %p102
    %p109 = scmp.eq.s32.totalorder %s9, 1
    %p110 = por %p108, %p109
    %p111 = scmp.ne.s32.totalorder %s103, %s106
    %p112 = scmp.eq.s32.totalorder %s9, 0
    %p113 = por %p111, %p112
    %p114 = scmp.ne.s32.totalorder %s103, %s106
    %p115 = scmp.eq.s32.totalorder %s14, 1
    %p116 = por %p114, %p115
    %p117 = scmp.ne.s32.totalorder %s106, %s107
    %p118 = scmp.eq.s32.totalorder %s14, 0
    %p119 = por %p117, %p118
    %p120 = scmp.ne.s32.totalorder %s106, %s107
    %p121 = scmp.eq.s32.totalorder %s15, 1
    %p122 = por %p120, %p121
    %p124 = scmp.ne.s32.totalorder %s107, %s123
    %p125 = scmp.eq.s32.totalorder %s15, 0
    %p126 = por %p124, %p125
    %p127 = scmp.le.s32.totalorder 1, %s9
    %p128 = scmp.lt.s32.totalorder %s9, 3
    %p129 = pnand %p127, %p128
    %p130 = pneg %p129
    // Predicated region
    $region9: #{tpu_custom_call.1} parent=5 // pred_check
      _
    $region10: #{tpu_custom_call.1} parent=5 // pred_check_branch
      %132 = sbr.rel (%p129) target = $region12
    $region11: #{tpu_custom_call.1} parent=5 // pred_region
      %s133 = ssub.s32 %s9, 1
      // Predicated region
      $region13: #{tpu_custom_call.1} parent=11 // pred_check
        %p134 = pneg %p70
      $region14: #{tpu_custom_call.1} parent=11 // pred_check_branch
        %136 = sbr.rel (%p134) target = $region16
      $region15: #{tpu_custom_call.1} parent=11 // pred_region
        _
      $region16: #{tpu_custom_call.1} parent=11 // pred_fallthru
        _
      // Predicated region
      $region17: #{tpu_custom_call.1} parent=11 // pred_check
        %p137 = pneg %p91
      $region18: #{tpu_custom_call.1} parent=11 // pred_check_branch
        %139 = sbr.rel (%p137) target = $region20
      $region19: #{tpu_custom_call.1} parent=11 // pred_region
        _
      $region20: #{tpu_custom_call.1} parent=11 // pred_fallthru
        _
    $region12: #{tpu_custom_call.1} parent=5 // pred_fallthru
      _
    %p140 = scmp.lt.s32.totalorder %s9, 2
    // Predicated region
    $region21: #{tpu_custom_call.1} parent=5 // pred_check
      %p141 = pneg %p140
    $region22: #{tpu_custom_call.1} parent=5 // pred_check_branch
      %143 = sbr.rel (%p141) target = $region24
    $region23: #{tpu_custom_call.1} parent=5 // pred_region
      // Predicated region
      $region25: #{tpu_custom_call.1} parent=23 // pred_check
        %p144 = pneg %p43
      $region26: #{tpu_custom_call.1} parent=23 // pred_check_branch
        %146 = sbr.rel (%p144) target = $region28
      $region27: #{tpu_custom_call.1} parent=23 // pred_region
        %p147 = scmp.lt.s32.totalorder %s16, 1
        %s148 = scalar_select %p147, %s16, 1
        %p149 = scmp.lt.s32.totalorder %s17, 0
        %s150 = scalar_select %p149, %s17, 0
        %s151 = smul.addr %s148, 4
        %s152 = sadd.s32 %s150, %s151
        %s153 = smul.addr %s152, 8
        %s154 = scalar_lea.vmem %s0, %s153
      $region28: #{tpu_custom_call.1} parent=23 // pred_fallthru
        _
    $region24: #{tpu_custom_call.1} parent=5 // pred_fallthru
      _
    %p155 = scmp.le.s32.totalorder 1, %s9
    %p156 = scmp.lt.s32.totalorder %s9, 3
    %p157 = pnand %p155, %p156
    %p158 = pneg %p157
    // Predicated region
    $region29: #{tpu_custom_call.1} parent=5 // pred_check
      _
    $region30: #{tpu_custom_call.1} parent=5 // pred_check_branch
      %160 = sbr.rel (%p157) target = $region32
    $region31: #{tpu_custom_call.1} parent=5 // pred_region
      %s161 = ssub.s32 %s9, 1
      %p162 = scmp.lt.s32.totalorder %s18, 1
      %s163 = scalar_select %p162, %s18, 1
      %p164 = scmp.lt.s32.totalorder %s19, 0
      %s165 = scalar_select %p164, %s19, 0
      %s166 = smul.addr %s163, 4
      %s167 = sadd.s32 %s165, %s166
      %s168 = smul.addr %s167, 8
      %s169 = scalar_lea.vmem %s0, %s168
      %p170 = pneg %p49
      %p171 = pneg %p46
      %p172 = pneg %p70
      %p173 = pneg %p67
      %p174 = pneg %p91
      %p175 = pneg %p88
      %p176 = pneg %p119
      %p177 = pneg %p116
      %p178 = scmp.lt.s32.totalorder %s18, 1
      %s179 = scalar_select %p178, %s18, 1
      %p180 = scmp.lt.s32.totalorder %s19, 0
      %s181 = scalar_select %p180, %s19, 0
      %s182 = smul.addr %s179, 4
      %s183 = sadd.s32 %s181, %s182
      %s184 = smul.addr %s183, 8
      %s185 = scalar_lea.vmem %s3, %s184
      %p186 = scmp.lt.s32.totalorder %s18, 1
      %s187 = scalar_select %p186, %s18, 1
      %p188 = scmp.lt.s32.totalorder %s19, 0
      %s189 = scalar_select %p188, %s19, 0
      %s190 = smul.addr %s187, 4
      %s191 = sadd.s32 %s189, %s190
      %s192 = smul.addr %s191, 8
      %s193 = scalar_lea.vmem %s0, %s192
      %p194 = scmp.lt.s32.totalorder %s18, 1
      %s195 = scalar_select %p194, %s18, 1
      %p196 = scmp.lt.s32.totalorder %s19, 0
      %s197 = scalar_select %p196, %s19, 0
      %s198 = smul.addr %s195, 4
      %s199 = sadd.s32 %s197, %s198
      %s200 = smul.addr %s199, 8
      %s201 = scalar_lea.vmem %s3, %s200
      %v202 = vld [vmem:[%s193] sm:$0xff]
      %v203 = vld [vmem:[%s193 + $0x8] sm:$0xff]
      %v204 = vld [vmem:[%s193 + $0x10] sm:$0xff]
      %v205 = vld [vmem:[%s193 + $0x18] sm:$0xff]
      %vm206 = vcmask 64512
      %v207 = vsel %vm206, %v202, 0.0
      %v208 = vsel %vm206, %v203, 0.0
      %v209 = vadd.f32 %v207, %v208
      %v210 = vsel %vm206, %v204, 0.0
      %v211 = vadd.f32 %v209, %v210
      %v212 = vsel %vm206, %v205, 0.0
      %v213 = vadd.f32 %v211, %v212
      %v214 = vrot.slane %v213, 4
      %v215 = vadd.f32 %v213, %v214
      %v216 = vrot.slane %v215, 2
      %v217 = vadd.f32 %v215, %v216
      %v218 = vrot.slane %v217, 1
      %v219 = vadd.f32 %v217, %v218
      %v220 = vrcp.pop 32.0
      %v221 = vmul.f32 %v219, %v220
      %v222 = vsub.f32 %v202, %v221
      %v223 = vsub.f32 %v203, %v221
      %v224 = vsub.f32 %v204, %v221
      %v225 = vsub.f32 %v205, %v221
      %v226 = vmul.f32 %v222, %v222
      %v227 = vmul.f32 %v223, %v223
      %v228 = vmul.f32 %v224, %v224
      %v229 = vmul.f32 %v225, %v225
      %v230 = vsel %vm206, %v226, 0.0
      %v231 = vsel %vm206, %v227, 0.0
      %v232 = vadd.f32 %v230, %v231
      %v233 = vsel %vm206, %v228, 0.0
      %v234 = vadd.f32 %v232, %v233
      %v235 = vsel %vm206, %v229, 0.0
      %v236 = vadd.f32 %v234, %v235
      %v237 = vrot.slane %v236, 4
      %v238 = vadd.f32 %v236, %v237
      %v239 = vrot.slane %v238, 2
      %v240 = vadd.f32 %v238, %v239
      %v241 = vrot.slane %v240, 1
      %v242 = vadd.f32 %v240, %v241
      %v243 = vmul.f32 %v242, %v220
      %v244 = vadd.f32 %v243, 1e-05
      %v245 = vrsqrt.pop %v244
      %v246 = vmul.f32 %v222, %v245
      %v247 = vmul.f32 %v223, %v245
      %v248 = vmul.f32 %v224, %v245
      %v249 = vmul.f32 %v225, %v245
      %v250 = vld [vmem:[%s2] sm:$0xff]
      %v251 = vld [vmem:[%s2 + $0x8] sm:$0xff]
      %v252 = vld [vmem:[%s2 + $0x10] sm:$0xff]
      %v253 = vld [vmem:[%s2 + $0x18] sm:$0xff]
      %255 = vset.pattern.permute.xlu0 0
      %256 = vperm.xlu0 %255, %v250
      %v257 = vpop.permute.xlu0 %256
      %260 = vset.pattern.permute.xlu0 0
      %261 = vperm.xlu0 %260, %v251
      %v262 = vpop.permute.xlu0 %261
      %265 = vset.pattern.permute.xlu0 0
      %266 = vperm.xlu0 %265, %v252
      %v267 = vpop.permute.xlu0 %266
      %270 = vset.pattern.permute.xlu0 0
      %271 = vperm.xlu0 %270, %v253
      %v272 = vpop.permute.xlu0 %271
      %v274 = vadd.f32 %v246, %v257
      %v275 = vadd.f32 %v247, %v262
      %v276 = vadd.f32 %v248, %v267
      %v277 = vadd.f32 %v249, %v272
      %v278 = vld [vmem:[%s1] sm:$0xff]
      %v279 = vld [vmem:[%s1 + $0x8] sm:$0xff]
      %v280 = vld [vmem:[%s1 + $0x10] sm:$0xff]
      %v281 = vld [vmem:[%s1 + $0x18] sm:$0xff]
      %283 = vset.pattern.permute.xlu0 0
      %284 = vperm.xlu0 %283, %v278
      %v285 = vpop.permute.xlu0 %284
      %288 = vset.pattern.permute.xlu0 0
      %289 = vperm.xlu0 %288, %v279
      %v290 = vpop.permute.xlu0 %289
      %293 = vset.pattern.permute.xlu0 0
      %294 = vperm.xlu0 %293, %v280
      %v295 = vpop.permute.xlu0 %294
      %298 = vset.pattern.permute.xlu0 0
      %299 = vperm.xlu0 %298, %v281
      %v300 = vpop.permute.xlu0 %299
      %v302 = vmul.f32 %v274, %v285
      %v303 = vmul.f32 %v275, %v290
      %v304 = vmul.f32 %v276, %v295
      %v305 = vmul.f32 %v277, %v300
      %306 = vst.msk [vmem:[%s201] sm:$0xff] %vm206, %v302
      %307 = vst.msk [vmem:[%s201 + $0x8] sm:$0xff] %vm206, %v303
      %308 = vst.msk [vmem:[%s201 + $0x10] sm:$0xff] %vm206, %v304
      %309 = vst.msk [vmem:[%s201 + $0x18] sm:$0xff] %vm206, %v305
      %p310 = scmp.lt.s32.totalorder %s18, 1
      %s311 = scalar_select %p310, %s18, 1
      %p312 = scmp.lt.s32.totalorder %s19, 0
      %s313 = scalar_select %p312, %s19, 0
      %s314 = smul.addr %s311, 4
      %s315 = sadd.s32 %s313, %s314
      %s316 = smul.addr %s315, 8
      %s317 = scalar_lea.vmem %s3, %s316
      // Predicated region
      $region33: #{tpu_custom_call.1} parent=31 // pred_check
        %p318 = pneg %p116
      $region34: #{tpu_custom_call.1} parent=31 // pred_check_branch
        %320 = sbr.rel (%p318) target = $region36
      $region35: #{tpu_custom_call.1} parent=31 // pred_region
        _
      $region36: #{tpu_custom_call.1} parent=31 // pred_fallthru
        _
    $region32: #{tpu_custom_call.1} parent=5 // pred_fallthru
      _
    %p321 = scmp.le.s32.totalorder 2, %s9
    // Predicated region
    $region37: #{tpu_custom_call.1} parent=5 // pred_check
      %p322 = pneg %p321
    $region38: #{tpu_custom_call.1} parent=5 // pred_check_branch
      %324 = sbr.rel (%p322) target = $region40
    $region39: #{tpu_custom_call.1} parent=5 // pred_region
      %s325 = ssub.s32 %s9, 2
      // Predicated region
      $region41: #{tpu_custom_call.1} parent=39 // pred_check
        %p326 = pneg %p122
      $region42: #{tpu_custom_call.1} parent=39 // pred_check_branch
        %328 = sbr.rel (%p326) target = $region44
      $region43: #{tpu_custom_call.1} parent=39 // pred_region
        %p329 = scmp.lt.s32.totalorder %s20, 1
        %s330 = scalar_select %p329, %s20, 1
        %p331 = scmp.lt.s32.totalorder %s21, 0
        %s332 = scalar_select %p331, %s21, 0
        %s333 = smul.addr %s330, 4
        %s334 = sadd.s32 %s332, %s333
        %s335 = smul.addr %s334, 8
        %s336 = scalar_lea.vmem %s3, %s335
      $region44: #{tpu_custom_call.1} parent=39 // pred_fallthru
        _
    $region40: #{tpu_custom_call.1} parent=5 // pred_fallthru
      _
  $region6: #{tpu_custom_call.1} parent=0 // loop_footer
    %s13 = sadd.s32 1, %s9
  $region7: #{tpu_custom_call.1} parent=0 // loop_footer_branch
    %8 = sbr.rel target = $region3
  $region8: #{tpu_custom_call.1} parent=0 // loop_exit
    _

</llo_original>
